<compile_context>
chip_gen: v5e
topology: v5e:2x2
jax: 0.10.0
libtpu: 0.0.40
codegen_flags: <defaults>
</compile_context>

<pallas_src>
import functools

import jax
import jax.numpy as jnp
from jax.experimental import pallas as pl
from jax.experimental.pallas import tpu as pltpu

LANES = 128
TILE_ROWS_MAX = 2048   # (2048, 128) f32 block = 1 MiB per buffer; with double
                       # buffering of f32 logits + bf16 targets ~3 MiB VMEM.
NUM_CORES = 2          # leading "parallel" grid axis; shards the reduction
                       # across both TensorCores on megacore parts, harmless
                       # (at most one skipped tile) on single-core chips.


def _focal_kernel(x_ref, t_ref, o_ref, *, tiles_per_core, total_tiles,
                  n_full_tiles, n_full_rows, n_rem_cols, tile_rows):
    c = pl.program_id(0)          # core split (parallel)
    i = pl.program_id(1)          # row-tile within this core (arbitrary)
    gt = c * tiles_per_core + i   # global tile index

    # Zero this core's resident (1, 8, 128) accumulator block at its first step.
    @pl.when(i == 0)
    def _():
        o_ref[...] = jnp.zeros_like(o_ref)

    # Per-element BCE with PyTorch F.binary_cross_entropy semantics:
    # sigmoid first, each log term clamped at -100.  Computed once per tile
    # (shared by both the fast and the masked path below).
    x = x_ref[...].astype(jnp.float32)
    t = t_ref[...].astype(jnp.float32)
    p = jax.nn.sigmoid(x)
    log_p = jnp.maximum(jnp.log(p), -100.0)
    log_1mp = jnp.maximum(jnp.log(1.0 - p), -100.0)
    elem = -(t * log_p + (1.0 - t) * log_1mp)

    def accumulate(e):
        # vreg-shaped partial sums: pure VPU adds, no per-tile XLU reduce.
        psum = e.reshape(tile_rows // 8, 8, LANES).sum(axis=0)
        o_ref[...] += psum[None]

    # Fast path: tile lies fully inside the valid element range -> no masking.
    @pl.when(gt < n_full_tiles)
    def _():
        accumulate(elem)

    # Boundary tile: mask out padded / out-of-range elements by global row/col
    # index (no flat multiply -> no int32 overflow).  Clamped overflow tiles
    # (gt >= total_tiles, only possible on the second "core") are skipped.
    @pl.when(jnp.logical_and(gt >= n_full_tiles, gt < total_tiles))
    def _():
        rows = jax.lax.broadcasted_iota(jnp.int32, elem.shape, 0) + gt * tile_rows
        mask = rows < n_full_rows
        if n_rem_cols:  # trace-time constant
            cols = jax.lax.broadcasted_iota(jnp.int32, elem.shape, 1)
            mask = jnp.logical_or(
                mask, jnp.logical_and(rows == n_full_rows, cols < n_rem_cols))
        accumulate(jnp.where(mask, elem, 0.0))


def focal_loss(inputs, targets, alpha=0.8, gamma=2):
    x = inputs.reshape(-1)
    t = targets.reshape(-1)
    if not jnp.issubdtype(t.dtype, jnp.floating):
        # 0/1 integer/bool targets are exact in bf16 -> lossless, half the traffic.
        t = t.astype(jnp.bfloat16)
    n = x.shape[0]

    # Only pad when numel is not lane-aligned (rare); otherwise the reshape to
    # (rows, 128) is a no-copy view.  Padded elements are masked in-kernel.
    rem = n % LANES
    if rem:
        pad = LANES - rem
        x = jnp.pad(x, (0, pad))
        t = jnp.pad(t, (0, pad))
    num_rows = x.shape[0] // LANES
    x2 = x.reshape(num_rows, LANES)
    t2 = t.reshape(num_rows, LANES)

    # Tile rows: big streaming tile, multiple of 16 (bf16 sublane packing),
    # shrunk for small inputs.
    tile_rows = min(TILE_ROWS_MAX, ((num_rows + 15) // 16) * 16)
    block_elems = tile_rows * LANES
    total_tiles = pl.cdiv(num_rows, tile_rows)
    tiles_per_core = pl.cdiv(total_tiles, NUM_CORES)
    n_full_tiles = n // block_elems  # tiles with no invalid element

    def in_map(c, i):
        # Clamp so an over-run tile on the second core re-reads the last valid
        # block (that tile's accumulation is skipped in-kernel).
        return (jnp.minimum(c * tiles_per_core + i, total_tiles - 1), 0)

    kernel = functools.partial(
        _focal_kernel,
        tiles_per_core=tiles_per_core,
        total_tiles=total_tiles,
        n_full_tiles=n_full_tiles,
        n_full_rows=n // LANES,
        n_rem_cols=n % LANES,
        tile_rows=tile_rows,
    )

    partial_sums = pl.pallas_call(
        kernel,
        out_shape=jax.ShapeDtypeStruct((NUM_CORES, 8, LANES), jnp.float32),
        grid=(NUM_CORES, tiles_per_core),
        in_specs=[
            pl.BlockSpec((tile_rows, LANES), in_map),
            pl.BlockSpec((tile_rows, LANES), in_map),
        ],
        out_specs=pl.BlockSpec((1, 8, LANES), lambda c, i: (c, 0, 0)),
        compiler_params=pltpu.CompilerParams(
            dimension_semantics=("parallel", "arbitrary")),
    )(x2, t2)

    # Tiny epilogue: combine per-core vreg partials, mean, focal transform.
    bce = partial_sums.sum() / jnp.float32(n)
    bce_exp = jnp.exp(-bce)
    return alpha * (1.0 - bce_exp) ** gamma * bce


def _focal_loss_ref(inputs, targets, alpha=0.8, gamma=2):
    p = jax.nn.sigmoid(inputs.reshape(-1).astype(jnp.float32))
    t = targets.reshape(-1).astype(jnp.float32)
    bce = -jnp.mean(
        t * jnp.maximum(jnp.log(p), -100.0)
        + (1.0 - t) * jnp.maximum(jnp.log(1.0 - p), -100.0)
    )
    return alpha * (1.0 - jnp.exp(-bce)) ** gamma * bce


if __name__ == "__main__":
    key = jax.random.PRNGKey(0)
    k_in, k_tg = jax.random.split(key)

    # NCHW logits and binary targets, as the PyTorch module expects.
    inputs = jax.random.normal(k_in, (2, 4, 16, 16), dtype=jnp.float32)
    targets = jax.random.bernoulli(k_tg, 0.5, (2, 4, 16, 16)).astype(jnp.bfloat16)

    loss = focal_loss(inputs, targets, alpha=0.8, gamma=2)
    jax.block_until_ready(loss)

    ref = _focal_loss_ref(inputs, targets, alpha=0.8, gamma=2)
    assert jnp.allclose(loss, ref, rtol=1e-5, atol=1e-6), (loss, ref)

    print("KERNEL_OK")
</pallas_src>

<mosaic_0001>
module attributes {stable_mosaic.version = 11 : i64} {
  func.func @_focal_kernel(%arg0: i32, %arg1: i32, %arg2: memref<16x128xf32, #tpu.memory_space<vmem>>, %arg3: memref<16x128xbf16, #tpu.memory_space<vmem>>, %arg4: memref<1x8x128xf32, #tpu.memory_space<vmem>>) attributes {dimension_semantics = [#tpu.dimension_semantics<parallel>, #tpu.dimension_semantics<arbitrary>], iteration_bounds = array<i64: 2, 1>, scalar_prefetch = 0 : i64, scratch_operands = 0 : i64, tpu.core_type = #tpu.core_type<tc>, window_params = [{transform_indices = @transform_0, window_bounds = array<i64: 16, 128>}, {transform_indices = @transform_1, window_bounds = array<i64: 16, 128>}, {transform_indices = @transform_2, window_bounds = array<i64: 1, 8, 128>}]} {
    %c1_i32 = arith.constant 1 : i32
    %0 = arith.muli %arg0, %c1_i32 : i32
    %1 = arith.addi %0, %arg1 : i32
    %c0_i32 = arith.constant 0 : i32
    %2 = arith.cmpi eq, %arg1, %c0_i32 : i32
    %3 = arith.extui %2 : i1 to i32
    %c0_i32_0 = arith.constant 0 : i32
    %4 = arith.cmpi ne, %3, %c0_i32_0 : i32
    scf.if %4 {
      %cst_14 = arith.constant 0.000000e+00 : f32
      %36 = vector.broadcast %cst_14 : f32 to vector<1x8x128xf32>
      %c0_15 = arith.constant 0 : index
      %c0_16 = arith.constant 0 : index
      %c0_17 = arith.constant 0 : index
      %37 = vector.load %arg4[%c0_15, %c0_16, %c0_17] : memref<1x8x128xf32, #tpu.memory_space<vmem>>, vector<1x8x128xf32>
      tpu.vector_store %arg4[%c0_15, %c0_16, %c0_17], %36 {strides = array<i32>} : memref<1x8x128xf32, #tpu.memory_space<vmem>>, vector<1x8x128xf32>,
    } else {
    }
    %c0 = arith.constant 0 : index
    %c0_1 = arith.constant 0 : index
    %5 = vector.load %arg2[%c0, %c0_1] : memref<16x128xf32, #tpu.memory_space<vmem>>, vector<16x128xf32>
    %c0_2 = arith.constant 0 : index
    %c0_3 = arith.constant 0 : index
    %6 = vector.load %arg3[%c0_2, %c0_3] : memref<16x128xbf16, #tpu.memory_space<vmem>>, vector<16x128xbf16>
    %7 = arith.extf %6 : vector<16x128xbf16> to vector<16x128xf32>
    %8 = arith.negf %5 : vector<16x128xf32>
    %9 = math.exp %8 : vector<16x128xf32>
    %cst = arith.constant 1.000000e+00 : f32
    %10 = vector.broadcast %cst : f32 to vector<16x128xf32>
    %11 = arith.addf %10, %9 : vector<16x128xf32>
    %12 = arith.divf %10, %11 : vector<16x128xf32>
    %13 = math.log %12 : vector<16x128xf32>
    %cst_4 = arith.constant -1.000000e+02 : f32
    %14 = vector.broadcast %cst_4 : f32 to vector<16x128xf32>
    %15 = arith.maximumf %13, %14 : vector<16x128xf32>
    %cst_5 = arith.constant 1.000000e+00 : f32
    %16 = vector.broadcast %cst_5 : f32 to vector<16x128xf32>
    %17 = arith.subf %16, %12 : vector<16x128xf32>
    %18 = math.log %17 : vector<16x128xf32>
    %cst_6 = arith.constant -1.000000e+02 : f32
    %19 = vector.broadcast %cst_6 : f32 to vector<16x128xf32>
    %20 = arith.maximumf %18, %19 : vector<16x128xf32>
    %21 = arith.mulf %7, %15 : vector<16x128xf32>
    %cst_7 = arith.constant 1.000000e+00 : f32
    %22 = vector.broadcast %cst_7 : f32 to vector<16x128xf32>
    %23 = arith.subf %22, %7 : vector<16x128xf32>
    %24 = arith.mulf %23, %20 : vector<16x128xf32>
    %25 = arith.addf %21, %24 : vector<16x128xf32>
    %cst_8 = arith.constant 0.000000e+00 : f32
    %26 = vector.broadcast %cst_8 : f32 to vector<16x128xf32>
    %27 = arith.subf %26, %25 : vector<16x128xf32>
    %c1_i32_9 = arith.constant 1 : i32
    %28 = arith.cmpi slt, %1, %c1_i32_9 : i32
    %29 = arith.extui %28 : i1 to i32
    %c0_i32_10 = arith.constant 0 : i32
    %30 = arith.cmpi ne, %29, %c0_i32_10 : i32
    scf.if %30 {
      %36 = vector.shape_cast %27 : vector<16x128xf32> to vector<2x8x128xf32>
      %cst_14 = arith.constant dense<0.000000e+00> : vector<8x128xf32>
      %37 = vector.multi_reduction <add>, %36, %cst_14 [0] : vector<2x8x128xf32> to vector<8x128xf32>
      %c0_15 = arith.constant 0 : index
      %c0_16 = arith.constant 0 : index
      %c0_17 = arith.constant 0 : index
      %38 = vector.load %arg4[%c0_15, %c0_16, %c0_17] : memref<1x8x128xf32, #tpu.memory_space<vmem>>, vector<1x8x128xf32>
      %39 = vector.shape_cast %37 : vector<8x128xf32> to vector<1x8x128xf32>
      %40 = arith.addf %38, %39 : vector<1x8x128xf32>
      %c0_18 = arith.constant 0 : index
      %c0_19 = arith.constant 0 : index
      %c0_20 = arith.constant 0 : index
      %41 = vector.load %arg4[%c0_18, %c0_19, %c0_20] : memref<1x8x128xf32, #tpu.memory_space<vmem>>, vector<1x8x128xf32>
      tpu.vector_store %arg4[%c0_18, %c0_19, %c0_20], %40 {strides = array<i32>} : memref<1x8x128xf32, #tpu.memory_space<vmem>>, vector<1x8x128xf32>,
    } else {
    }
    %c1_i32_11 = arith.constant 1 : i32
    %31 = arith.cmpi sge, %1, %c1_i32_11 : i32
    %c1_i32_12 = arith.constant 1 : i32
    %32 = arith.cmpi slt, %1, %c1_i32_12 : i32
    %33 = arith.andi %31, %32 : i1
    %34 = arith.extui %33 : i1 to i32
    %c0_i32_13 = arith.constant 0 : i32
    %35 = arith.cmpi ne, %34, %c0_i32_13 : i32
    scf.if %35 {
      %36 = tpu.iota {dimensions = array<i32: 0>} : vector<16x128xi32>
      %c16_i32 = arith.constant 16 : i32
      %37 = arith.muli %1, %c16_i32 : i32
      %38 = vector.broadcast %37 : i32 to vector<16x128xi32>
      %39 = arith.addi %36, %38 : vector<16x128xi32>
      %c16_i32_14 = arith.constant 16 : i32
      %40 = vector.broadcast %c16_i32_14 : i32 to vector<16x128xi32>
      %41 = arith.cmpi slt, %39, %40 : vector<16x128xi32>
      %cst_15 = arith.constant 0.000000e+00 : f32
      %42 = vector.broadcast %cst_15 : f32 to vector<16x128xf32>
      %43 = arith.select %41, %27, %42 : vector<16x128xi1>, vector<16x128xf32>
      %44 = vector.shape_cast %43 : vector<16x128xf32> to vector<2x8x128xf32>
      %cst_16 = arith.constant dense<0.000000e+00> : vector<8x128xf32>
      %45 = vector.multi_reduction <add>, %44, %cst_16 [0] : vector<2x8x128xf32> to vector<8x128xf32>
      %c0_17 = arith.constant 0 : index
      %c0_18 = arith.constant 0 : index
      %c0_19 = arith.constant 0 : index
      %46 = vector.load %arg4[%c0_17, %c0_18, %c0_19] : memref<1x8x128xf32, #tpu.memory_space<vmem>>, vector<1x8x128xf32>
      %47 = vector.shape_cast %45 : vector<8x128xf32> to vector<1x8x128xf32>
      %48 = arith.addf %46, %47 : vector<1x8x128xf32>
      %c0_20 = arith.constant 0 : index
      %c0_21 = arith.constant 0 : index
      %c0_22 = arith.constant 0 : index
      %49 = vector.load %arg4[%c0_20, %c0_21, %c0_22] : memref<1x8x128xf32, #tpu.memory_space<vmem>>, vector<1x8x128xf32>
      tpu.vector_store %arg4[%c0_20, %c0_21, %c0_22], %48 {strides = array<i32>} : memref<1x8x128xf32, #tpu.memory_space<vmem>>, vector<1x8x128xf32>,
    } else {
    }
    return
  }
  func.func @transform_0(%arg0: i32, %arg1: i32) -> (i32, i32) {
    %c1_i32 = arith.constant 1 : i32
    %0 = arith.muli %arg0, %c1_i32 : i32
    %1 = arith.addi %0, %arg1 : i32
    %c0_i32 = arith.constant 0 : i32
    %2 = arith.minsi %1, %c0_i32 : i32
    %c0_i32_0 = arith.constant 0 : i32
    %c0_i32_1 = arith.constant 0 : i32
    return %2, %c0_i32_0 : i32, i32
  }
  func.func @transform_1(%arg0: i32, %arg1: i32) -> (i32, i32) {
    %c1_i32 = arith.constant 1 : i32
    %0 = arith.muli %arg0, %c1_i32 : i32
    %1 = arith.addi %0, %arg1 : i32
    %c0_i32 = arith.constant 0 : i32
    %2 = arith.minsi %1, %c0_i32 : i32
    %c0_i32_0 = arith.constant 0 : i32
    %c0_i32_1 = arith.constant 0 : i32
    return %2, %c0_i32_0 : i32, i32
  }
  func.func @transform_2(%arg0: i32, %arg1: i32) -> (i32, i32, i32) {
    %c0_i32 = arith.constant 0 : i32
    %c0_i32_0 = arith.constant 0 : i32
    %c0_i32_1 = arith.constant 0 : i32
    return %arg0, %c0_i32, %c0_i32_0 : i32, i32, i32
  }
}

</mosaic_0001>

<llo_original>
// kernel: tpu_custom_call.1
$region0: #{tpu_custom_call.1}
  #allocation0 [shape = 'u32[]', space=smem, size = 0x4, offset = 0x4, fixed_abs, tag = 'smem constant byte address 0x4 - core index']
  #allocation1 [shape = 'u32[72,128]{1,0:T(1,128)}', space=vmem, size = 0x9000, scoped, tag = 'internal scratch']
  %s0 = inlined_call_operand.hbm [shape: f32[16,128], index: 0, kind: input, shape index: {}]
  %s1 = inlined_call_operand.hbm [shape: bf16[16,128], index: 1, kind: input, shape index: {}]
  %s2 = inlined_call_operand.hbm [shape: f32[2,8,128], index: 2, kind: output, shape index: {}]
  %s3 = sld [smem:[#allocation0]]
  $region61: #{tpu_custom_call.1} parent=0
    _
  %s5 = ssub.s32 1, %s3
  %s6 = scalar_select 0, %s5, %s3
  $region1: #{tpu_custom_call.1} parent=0
    #allocation2 [shape = 'u8[16384]{0}', space=vmem, size = 0x4000, scoped, tag = 'input window, operand 0']
    #allocation3 [shape = 's32[2]{0}', space=sflag, size = 0x8, scoped, tag = 'scoped memory for tpu_custom_call.1']
    #allocation4 [shape = 's32[2]{0}', space=sflag, size = 0x8, scoped, tag = 'scoped memory for tpu_custom_call.1']
    #allocation5 [shape = 'u8[8192]{0}', space=vmem, size = 0x2000, scoped, tag = 'input window, operand 1']
    #allocation6 [shape = 's32[2]{0}', space=sflag, size = 0x8, scoped, tag = 'scoped memory for tpu_custom_call.1']
    #allocation7 [shape = 'u8[8192]{0}', space=vmem, size = 0x2000, scoped, tag = 'output window, operand 0']
    %7 = vsyncpa [#allocation3], 0
    %s8 = scalar_lea.sflag [#allocation3], 1
    %9 = vsyncpa %s8, 0
    %10 = vsyncpa [#allocation6], 0
    %s11 = scalar_lea.sflag [#allocation6], 1
    %12 = vsyncpa %s11, 0
    %13 = vsyncpa [#allocation4], 0
    %s14 = scalar_lea.sflag [#allocation4], 1
    %15 = vsyncpa %s14, 0
    loop: start=0, step=1, limit=4
    $region2: #{tpu_custom_call.1} parent=1 // loop_pre_header
      _
    $region3: #{tpu_custom_call.1} parent=1 // loop_header
      %s17 = sphi 0, %s21
      %p18 = scmp.ge.s32.totalorder %s17, 4
      %s24 = sphi 0, %s36
      %s25 = sphi 0, %s32
      %s26 = sphi 0, %s24
      %s27 = sphi 0, %s25
      %s28 = sphi 0, %s26
      %s29 = sphi 0, %s27
      %s45 = sphi 0, %s47
      %s48 = sphi 0, %s45
      %s49 = sphi 0, %s48
      %s65 = sphi 0, %s49
      %s77 = sphi 0, %s79
      %s80 = sphi 0, %s77
      %s81 = sphi 0, %s80
      %s97 = sphi 0, %s81
      %s103 = sphi 0, %s105
      %s106 = sphi 0, %s103
      %s107 = sphi 0, %s106
      %s123 = sphi 0, %s107
    $region4: #{tpu_custom_call.1} parent=1 // loop_header_branch
      %20 = sbr.rel (%p18) target = $region8
    $region5: #{tpu_custom_call.1} parent=1 // loop_body
      %s22 = ssub.s32 %s17, 1
      %s23 = ssub.s32 %s17, 2
      %s30 = sadd.s32 1, %s25
      %p31 = scmp.ge.s32.totalorder %s30, 1
      %s32 = scalar_select %p31, 0, %s30
      %s33 = sadd.s32 1, %s24
      %s34 = scalar_select %p31, %s33, %s24
      %p35 = scmp.ge.s32.totalorder %s34, 2
      %s36 = scalar_select %p35, 0, %s34
      %s37 = sadd.s32 %s24, %s25
      %p38 = scmp.lt.s32.totalorder %s37, 0
      %s39 = scalar_select %p38, %s37, 0
      %s40 = sadd.s32 %s36, %s32
      %p41 = scmp.lt.s32.totalorder %s40, 0
      %s42 = scalar_select %p41, %s40, 0
      %s43 = ssub.s32 %s39, %s42
      %p44 = scmp.eq.s32.totalorder %s43, 0
      %s46 = sadd.s32 %s45, 1
      %s47 = scalar_select %p44, %s45, %s46
      %p50 = pneg %p44
      %p51 = scmp.eq.s32.totalorder %s17, 1
      %p52 = por %p50, %p51
      %p53 = scmp.ne.s32.totalorder %s45, %s48
      %p54 = scmp.eq.s32.totalorder %s17, 0
      %p55 = por %p53, %p54
      %p56 = scmp.ne.s32.totalorder %s45, %s48
      %p57 = scmp.eq.s32.totalorder %s22, 1
      %p58 = por %p56, %p57
      %p59 = scmp.ne.s32.totalorder %s48, %s49
      %p60 = scmp.eq.s32.totalorder %s22, 0
      %p61 = por %p59, %p60
      %p62 = scmp.ne.s32.totalorder %s48, %s49
      %p63 = scmp.eq.s32.totalorder %s23, 1
      %p64 = por %p62, %p63
      %p66 = scmp.ne.s32.totalorder %s49, %s65
      %p67 = scmp.eq.s32.totalorder %s23, 0
      %p68 = por %p66, %p67
      %s69 = sadd.s32 %s24, %s25
      %p70 = scmp.lt.s32.totalorder %s69, 0
      %s71 = scalar_select %p70, %s69, 0
      %s72 = sadd.s32 %s36, %s32
      %p73 = scmp.lt.s32.totalorder %s72, 0
      %s74 = scalar_select %p73, %s72, 0
      %s75 = ssub.s32 %s71, %s74
      %p76 = scmp.eq.s32.totalorder %s75, 0
      %s78 = sadd.s32 %s77, 1
      %s79 = scalar_select %p76, %s77, %s78
      %p82 = pneg %p76
      %p83 = scmp.eq.s32.totalorder %s17, 1
      %p84 = por %p82, %p83
      %p85 = scmp.ne.s32.totalorder %s77, %s80
      %p86 = scmp.eq.s32.totalorder %s17, 0
      %p87 = por %p85, %p86
      %p88 = scmp.ne.s32.totalorder %s77, %s80
      %p89 = scmp.eq.s32.totalorder %s22, 1
      %p90 = por %p88, %p89
      %p91 = scmp.ne.s32.totalorder %s80, %s81
      %p92 = scmp.eq.s32.totalorder %s22, 0
      %p93 = por %p91, %p92
      %p94 = scmp.ne.s32.totalorder %s80, %s81
      %p95 = scmp.eq.s32.totalorder %s23, 1
      %p96 = por %p94, %p95
      %p98 = scmp.ne.s32.totalorder %s81, %s97
      %p99 = scmp.eq.s32.totalorder %s23, 0
      %p100 = por %p98, %p99
      %s101 = ssub.s32 %s24, %s36
      %p102 = scmp.eq.s32.totalorder %s101, 0
      %s104 = sadd.s32 %s103, 1
      %s105 = scalar_select %p102, %s103, %s104
      %p108 = pneg %p102
      %p109 = scmp.eq.s32.totalorder %s17, 1
      %p110 = por %p108, %p109
      %p111 = scmp.ne.s32.totalorder %s103, %s106
      %p112 = scmp.eq.s32.totalorder %s17, 0
      %p113 = por %p111, %p112
      %p114 = scmp.ne.s32.totalorder %s103, %s106
      %p115 = scmp.eq.s32.totalorder %s22, 1
      %p116 = por %p114, %p115
      %p117 = scmp.ne.s32.totalorder %s106, %s107
      %p118 = scmp.eq.s32.totalorder %s22, 0
      %p119 = por %p117, %p118
      %p120 = scmp.ne.s32.totalorder %s106, %s107
      %p121 = scmp.eq.s32.totalorder %s23, 1
      %p122 = por %p120, %p121
      %p124 = scmp.ne.s32.totalorder %s107, %s123
      %p125 = scmp.eq.s32.totalorder %s23, 0
      %p126 = por %p124, %p125
      %p127 = scmp.le.s32.totalorder 1, %s17
      %p128 = scmp.lt.s32.totalorder %s17, 3
      %p129 = pnand %p127, %p128
      %p130 = pneg %p129
      // Predicated region
      $region9: #{tpu_custom_call.1} parent=5 // pred_check
        _
      $region10: #{tpu_custom_call.1} parent=5 // pred_check_branch
        %132 = sbr.rel (%p129) target = $region12
      $region11: #{tpu_custom_call.1} parent=5 // pred_region
        %s133 = ssub.s32 %s17, 1
      $region12: #{tpu_custom_call.1} parent=5 // pred_fallthru
        _
      %p134 = scmp.lt.s32.totalorder %s17, 2
      // Predicated region
      $region13: #{tpu_custom_call.1} parent=5 // pred_check
        %p135 = pneg %p134
      $region14: #{tpu_custom_call.1} parent=5 // pred_check_branch
        %137 = sbr.rel (%p135) target = $region16
      $region15: #{tpu_custom_call.1} parent=5 // pred_region
        // Predicated region
        $region17: #{tpu_custom_call.1} parent=15 // pred_check
          %p138 = pneg %p55
        $region18: #{tpu_custom_call.1} parent=15 // pred_check_branch
          %140 = sbr.rel (%p138) target = $region20
        $region19: #{tpu_custom_call.1} parent=15 // pred_region
          %s141 = sand.u32 %s45, 1
          %s142 = scalar_lea.sflag [#allocation3], %s141
          %s143 = sand.u32 %s45, 1
          %s144 = smul.addr %s143, 16
          %s145 = scalar_lea.vmem [#allocation2], %s144
          %s146 = sadd.s32 %s24, %s25
          %p147 = scmp.lt.s32.totalorder %s146, 0
          %s148 = scalar_select %p147, %s146, 0
          %s149 = smul.u32 2, %s148
          %151 = vsyncadd %s142, 0
          %s152 = smul.addr %s149, 8
          %s153 = scalar_lea.hbm %s0, %s152
          %s154 = sshll.u32 %s153, 4
          %s155 = int_to_ptr.hbm [resolvable:$true] %s154
          %s156 = sshll.u32 %s145, 4
          %s157 = int_to_ptr.vmem [resolvable:$true] %s156
          %162 = dma.hbm_to_vmem [thread:$0]  %s155, 256, %s157, %s142, 128, 128, 8
        $region20: #{tpu_custom_call.1} parent=15 // pred_fallthru
          _
        // Predicated region
        $region21: #{tpu_custom_call.1} parent=15 // pred_check
          %p163 = pneg %p87
        $region22: #{tpu_custom_call.1} parent=15 // pred_check_branch
          %165 = sbr.rel (%p163) target = $region24
        $region23: #{tpu_custom_call.1} parent=15 // pred_region
          %s166 = sand.u32 %s77, 1
          %s167 = scalar_lea.sflag [#allocation6], %s166
          %s168 = sand.u32 %s77, 1
          %s169 = smul.addr %s168, 8
          %s170 = scalar_lea.vmem [#allocation5], %s169
          %s171 = sadd.s32 %s24, %s25
          %p172 = scmp.lt.s32.totalorder %s171, 0
          %s173 = scalar_select %p172, %s171, 0
          %s174 = smul.u32 2, %s173
          %176 = vsyncadd %s167, 0
          %s177 = smul.addr %s174, 4
          %s178 = scalar_lea.hbm %s1, %s177
          %s179 = sshll.u32 %s178, 4
          %s180 = int_to_ptr.hbm [resolvable:$true] %s179
          %s181 = sshll.u32 %s170, 4
          %s182 = int_to_ptr.vmem [resolvable:$true] %s181
          %187 = dma.hbm_to_vmem [thread:$0]  %s180, 128, %s182, %s167, 64, 64, 4
        $region24: #{tpu_custom_call.1} parent=15 // pred_fallthru
          _
      $region16: #{tpu_custom_call.1} parent=5 // pred_fallthru
        _
      %p188 = scmp.le.s32.totalorder 1, %s17
      %p189 = scmp.lt.s32.totalorder %s17, 3
      %p190 = pnand %p188, %p189
      %p191 = pneg %p190
      // Predicated region
      $region25: #{tpu_custom_call.1} parent=5 // pred_check
        _
      $region26: #{tpu_custom_call.1} parent=5 // pred_check_branch
        %193 = sbr.rel (%p190) target = $region28
      $region27: #{tpu_custom_call.1} parent=5 // pred_region
        %s194 = ssub.s32 %s17, 1
        %s195 = sand.u32 %s48, 1
        %s196 = scalar_lea.sflag [#allocation3], %s195
        %s197 = sand.u32 %s48, 1
        %s198 = smul.addr %s197, 16
        %s199 = scalar_lea.vmem [#allocation2], %s198
        // Predicated region
        $region29: #{tpu_custom_call.1} parent=27 // pred_check
          %p200 = pneg %p61
        $region30: #{tpu_custom_call.1} parent=27 // pred_check_branch
          %202 = sbr.rel (%p200) target = $region32
        $region31: #{tpu_custom_call.1} parent=27 // pred_region
          %204 = dma.done %s196, 256
        $region32: #{tpu_custom_call.1} parent=27 // pred_fallthru
          _
        %s205 = sand.u32 %s80, 1
        %s206 = scalar_lea.sflag [#allocation6], %s205
        %s207 = sand.u32 %s80, 1
        %s208 = smul.addr %s207, 8
        %s209 = scalar_lea.vmem [#allocation5], %s208
        // Predicated region
        $region33: #{tpu_custom_call.1} parent=27 // pred_check
          %p210 = pneg %p93
        $region34: #{tpu_custom_call.1} parent=27 // pred_check_branch
          %212 = sbr.rel (%p210) target = $region36
        $region35: #{tpu_custom_call.1} parent=27 // pred_region
          %214 = dma.done %s206, 128
        $region36: #{tpu_custom_call.1} parent=27 // pred_fallthru
          _
        %s215 = sand.u32 %s48, 1
        %s216 = scalar_lea.sflag [#allocation3], %s215
        %s217 = sand.u32 %s48, 1
        %s218 = smul.addr %s217, 16
        %s219 = scalar_lea.vmem [#allocation2], %s218
        %p220 = pneg %p61
        %p221 = pneg %p58
        %s222 = sand.u32 %s80, 1
        %s223 = scalar_lea.sflag [#allocation6], %s222
        %s224 = sand.u32 %s80, 1
        %s225 = smul.addr %s224, 8
        %s226 = scalar_lea.vmem [#allocation5], %s225
        %p227 = pneg %p93
        %p228 = pneg %p90
        %p229 = pneg %p119
        %p230 = pneg %p116
        %s231 = sand.u32 %s106, 1
        %s232 = scalar_lea.sflag [#allocation4], %s231
        %s233 = sand.u32 %s106, 1
        %s234 = smul.addr %s233, 8
        %s235 = scalar_lea.vmem [#allocation7], %s234
        %s236 = sadd.s32 %s26, %s27
        %p237 = scmp.lt.s32.totalorder %s236, 0
        %s238 = scalar_select %p237, %s236, 0
        %s239 = smul.u32 2, %s238
        %s240 = sadd.s32 %s26, %s27
        %p241 = scmp.lt.s32.totalorder %s240, 0
        %s242 = scalar_select %p241, %s240, 0
        %s243 = smul.u32 2, %s242
        %s244 = sadd.s32 %s26, %s27
        %p245 = scmp.eq.s32.totalorder %s27, 0
        // Predicated region
        $region37: #{tpu_custom_call.1} parent=27 // pred_check
          %p246 = pneg %p245
        $region38: #{tpu_custom_call.1} parent=27 // pred_check_branch
          %248 = sbr.rel (%p246) target = $region40
        $region39: #{tpu_custom_call.1} parent=27 // pred_region
          %249 = vst [vmem:[%s235] sm:$0xff] 0.0
        $region40: #{tpu_custom_call.1} parent=27 // pred_fallthru
          _
        %v250 = vld [vmem:[%s199] sm:$0xff]
        %v251 = vld [vmem:[%s199 + $0x8] sm:$0xff]
        %v252 = vld [vmem:[%s209] sm:$0xf]
        %v253 = vld [vmem:[%s209 + $0x4] sm:$0xf]
        %v254 = vunpack.c.l.bf16 %v252
        %v255 = vunpack.c.l.bf16 %v253
        %v256 = vxor.u32 %v250, 2147483648
        %v257 = vxor.u32 %v251, 2147483648
        %v258 = vmul.f32 %v256, 1.442695
        %v259 = vpow.pop %v258
        %v260 = vmul.f32 %v257, 1.442695
        %v261 = vpow.pop %v260
        %v262 = vadd.f32 %v259, 1.0
        %v263 = vadd.f32 %v261, 1.0
        %v264 = vrcp.pop %v262
        %v265 = vmul.f32 %v262, %v264
        %v266 = vsub.f32 1.0, %v265
        %v267 = vmul.f32 %v264, %v266
        %v268 = vadd.f32 %v264, %v267
        %vm269 = vweird.f32 %v262
        %vm270 = vweird.f32 %v264
        %vm271 = vmor %vm269, %vm270
        %v272 = vsel %vm271, %v264, %v268
        %v273 = vand.u32 2147483647, %v262
        %vm274 = vcmp.eq.f32.partialorder %v273, 8.507059e+37
        %v275 = vand.u32 %v262, 2147483648
        %v276 = vor.u32 1.1754944e-38, %v275
        %v277 = vsel %vm274, %v276, %v272
        %v278 = vmul.f32 1.0, %v277
        %v279 = vrcp.pop %v263
        %v280 = vmul.f32 %v263, %v279
        %v281 = vsub.f32 1.0, %v280
        %v282 = vmul.f32 %v279, %v281
        %v283 = vadd.f32 %v279, %v282
        %vm284 = vweird.f32 %v263
        %vm285 = vweird.f32 %v279
        %vm286 = vmor %vm284, %vm285
        %v287 = vsel %vm286, %v279, %v283
        %v288 = vand.u32 2147483647, %v263
        %vm289 = vcmp.eq.f32.partialorder %v288, 8.507059e+37
        %v290 = vand.u32 %v263, 2147483648
        %v291 = vor.u32 1.1754944e-38, %v290
        %v292 = vsel %vm289, %v291, %v287
        %v293 = vmul.f32 1.0, %v292
        %v294 = vlog2.pop %v278
        %v295 = vmul.f32 %v294, 0.6931472
        %v296 = vlog2.pop %v293
        %v297 = vmul.f32 %v296, 0.6931472
        %v298 = vmax.f32 %v295, -100.0
        %v299 = vmax.f32 %v297, -100.0
        %v300 = vsub.f32 1.0, %v278
        %v301 = vsub.f32 1.0, %v293
        %v302 = vlog2.pop %v300
        %v303 = vmul.f32 %v302, 0.6931472
        %v304 = vlog2.pop %v301
        %v305 = vmul.f32 %v304, 0.6931472
        %v306 = vmax.f32 %v303, -100.0
        %v307 = vmax.f32 %v305, -100.0
        %v308 = vmul.f32 %v254, %v298
        %v309 = vmul.f32 %v255, %v299
        %v310 = vsub.f32 1.0, %v254
        %v311 = vsub.f32 1.0, %v255
        %v312 = vmul.f32 %v310, %v306
        %v313 = vmul.f32 %v311, %v307
        %v314 = vadd.f32 %v308, %v312
        %v315 = vadd.f32 %v309, %v313
        %v316 = vsub.f32 0.0, %v314
        %v317 = vsub.f32 0.0, %v315
        %p318 = scmp.lt.s32.totalorder %s244, 1
        // Predicated region
        $region41: #{tpu_custom_call.1} parent=27 // pred_check
          %p319 = pneg %p318
        $region42: #{tpu_custom_call.1} parent=27 // pred_check_branch
          %321 = sbr.rel (%p319) target = $region44
        $region43: #{tpu_custom_call.1} parent=27 // pred_region
          %v322 = vadd.f32 %v316, %v317
          %v323 = vld [vmem:[%s235] sm:$0xff]
          %v324 = vadd.f32 %v323, %v322
          %325 = vst [vmem:[%s235] sm:$0xff] %v324
        $region44: #{tpu_custom_call.1} parent=27 // pred_fallthru
          _
        %p326 = scmp.ge.s32.totalorder %s244, 1
        %p327 = pnand %p326, %p318
        %p328 = pneg %p327
        // Predicated region
        $region45: #{tpu_custom_call.1} parent=27 // pred_check
          _
        $region46: #{tpu_custom_call.1} parent=27 // pred_check_branch
          %330 = sbr.rel (%p327) target = $region48
        $region47: #{tpu_custom_call.1} parent=27 // pred_region
          %v331 = vlaneseq
          %v332 = vshrl.u32 %v331, 7
          %v333 = vadd.s32 %v332, 8
          %s334 = smul.u32 %s244, 16
          %v335 = vstv %s334
          %v336 = vadd.s32 %v332, %v335
          %v337 = vadd.s32 %v333, %v335
          %vm338 = vcmp.lt.s32.totalorder %v336, 16
          %vm339 = vcmp.lt.s32.totalorder %v337, 16
          %v340 = vsel %vm338, %v316, 0.0
          %v341 = vsel %vm339, %v317, 0.0
          %v342 = vadd.f32 %v340, %v341
          %v343 = vld [vmem:[%s235] sm:$0xff]
          %v344 = vadd.f32 %v343, %v342
          %345 = vst [vmem:[%s235] sm:$0xff] %v344
        $region48: #{tpu_custom_call.1} parent=27 // pred_fallthru
          _
        %s346 = sand.u32 %s106, 1
        %s347 = scalar_lea.sflag [#allocation4], %s346
        %s348 = sand.u32 %s106, 1
        %s349 = smul.addr %s348, 8
        %s350 = scalar_lea.vmem [#allocation7], %s349
        // Predicated region
        $region49: #{tpu_custom_call.1} parent=27 // pred_check
          %p351 = pneg %p116
        $region50: #{tpu_custom_call.1} parent=27 // pred_check_branch
          %353 = sbr.rel (%p351) target = $region52
        $region51: #{tpu_custom_call.1} parent=27 // pred_region
          %355 = vsyncadd %s347, 0
          %s356 = smul.addr %s26, 8
          %s357 = scalar_lea.hbm %s2, %s356
          %s359 = sshll.u32 %s350, 4
          %s360 = int_to_ptr.vmem [resolvable:$true] %s359
          %s361 = sshll.u32 %s357, 4
          %s362 = int_to_ptr.hbm [resolvable:$true] %s361
          %364 = dma.vmem_to_hbm [thread:$0]  %s360, 128, %s362, %s347
        $region52: #{tpu_custom_call.1} parent=27 // pred_fallthru
          _
      $region28: #{tpu_custom_call.1} parent=5 // pred_fallthru
        _
      %p365 = scmp.le.s32.totalorder 2, %s17
      // Predicated region
      $region53: #{tpu_custom_call.1} parent=5 // pred_check
        %p366 = pneg %p365
      $region54: #{tpu_custom_call.1} parent=5 // pred_check_branch
        %368 = sbr.rel (%p366) target = $region56
      $region55: #{tpu_custom_call.1} parent=5 // pred_region
        %s369 = ssub.s32 %s17, 2
        // Predicated region
        $region57: #{tpu_custom_call.1} parent=55 // pred_check
          %p370 = pneg %p122
        $region58: #{tpu_custom_call.1} parent=55 // pred_check_branch
          %372 = sbr.rel (%p370) target = $region60
        $region59: #{tpu_custom_call.1} parent=55 // pred_region
          %s373 = sand.u32 %s107, 1
          %s374 = scalar_lea.sflag [#allocation4], %s373
          %s375 = sand.u32 %s107, 1
          %s376 = smul.addr %s375, 8
          %s377 = scalar_lea.vmem [#allocation7], %s376
          %379 = dma.done %s374, 128
        $region60: #{tpu_custom_call.1} parent=55 // pred_fallthru
          _
      $region56: #{tpu_custom_call.1} parent=5 // pred_fallthru
        _
    $region6: #{tpu_custom_call.1} parent=1 // loop_footer
      %s21 = sadd.s32 1, %s17
    $region7: #{tpu_custom_call.1} parent=1 // loop_footer_branch
      %16 = sbr.rel target = $region3
    $region8: #{tpu_custom_call.1} parent=1 // loop_exit
      _
    %380 = vsyncpa [#allocation3], 1
    %s381 = scalar_lea.sflag [#allocation3], 1
    %382 = vsyncpa %s381, 1
    %383 = vsyncpa [#allocation6], 1
    %s384 = scalar_lea.sflag [#allocation6], 1
    %385 = vsyncpa %s384, 1
    %386 = vsyncpa [#allocation4], 1
    %s387 = scalar_lea.sflag [#allocation4], 1
    %388 = vsyncpa %s387, 1

</llo_original>
